<compile_context>
chip_gen: v7x
topology: tpu7x:2x2x1
jax: 0.10.0
libtpu: 0.0.40
codegen_flags: <defaults>
</compile_context>

<pallas_src>
import functools

import jax
import jax.numpy as jnp
from jax.experimental import pallas as pl
from jax.experimental.pallas import tpu as pltpu


# ---------------------------------------------------------------------------
# Tiling helpers
# ---------------------------------------------------------------------------

def _round_up(a, m):
    return ((a + m - 1) // m) * m


def _pick_chan_tile(n_chan, target):
    """Largest multiple-of-128 channel tile <= target that divides n_chan.
    Falls back to the full channel dim when tiling is impossible/unneeded."""
    target = max(int(target), 128)
    if n_chan <= target or n_chan % 128 != 0:
        return n_chan
    best = 128
    for t in range(256, target + 1, 128):
        if n_chan % t == 0:
            best = t
    return best


def _pick_row_tile(n_rows, row_elems, itemsize, target_bytes, row_pack):
    """Pick (tile_rows, chunk_rows).

    tile_rows is a multiple of chunk_rows; chunk_rows is a multiple of the
    dtype's sublane packing (and of 8).  tile_rows is sized so that one input
    block of row_elems columns stays within target_bytes.
    """
    bytes_per_row = max(1, row_elems * itemsize)
    rows_budget = max(row_pack,
                      (target_bytes // bytes_per_row) // row_pack * row_pack)
    candidate = min(rows_budget, _round_up(max(n_rows, 1), row_pack))
    if candidate >= 256:
        chunk = 256                       # multiple of 8 / 16 / 32
        tile = (candidate // 256) * 256
    else:
        chunk = candidate
        tile = candidate
    return tile, chunk


# ---------------------------------------------------------------------------
# Kernels
# ---------------------------------------------------------------------------

def _ab_kernel_2d(x_ref, out_ref, *, n_rows, tile_rows, chunk_rows, ragged):
    """Channel-last path.  x_ref: (tile_rows, c_tile) block of the flattened
    (n_rows, n_chan) input.  out_ref: (16, c_tile) f32 packed partial sums."""
    i = pl.program_id(0)                  # row-tile index
    c = x_ref.shape[1]
    g = chunk_rows // 8
    num_chunks = tile_rows // chunk_rows

    def run(masked):
        def body(k, carry):
            pos_acc, abs_acc = carry
            # chunk_rows is a static multiple of 8, so the start is
            # sublane-aligned by construction.
            start = k * chunk_rows
            x = x_ref[pl.ds(start, chunk_rows), :]
            pos = (x > 0).astype(jnp.float32)
            ax = jnp.abs(x).astype(jnp.float32)
            if masked:
                row = jax.lax.broadcasted_iota(jnp.int32, (chunk_rows, c), 0)
                valid = (row + start + i * tile_rows) < n_rows
                pos = jnp.where(valid, pos, 0.0)
                ax = jnp.where(valid, ax, 0.0)
            if g > 1:
                pos = jnp.sum(pos.reshape(g, 8, c), axis=0)
                ax = jnp.sum(ax.reshape(g, 8, c), axis=0)
            return pos_acc + pos, abs_acc + ax

        init = (jnp.zeros((8, c), jnp.float32), jnp.zeros((8, c), jnp.float32))
        if num_chunks == 1:
            pos_acc, abs_acc = body(0, init)
        else:
            pos_acc, abs_acc = jax.lax.fori_loop(
                0, num_chunks, body, init, unroll=num_chunks <= 8)
        out_ref[0:8, :] = pos_acc
        out_ref[8:16, :] = abs_acc

    if ragged:
        is_last = i == pl.num_programs(0) - 1

        @pl.when(jnp.logical_not(is_last))
        def _():
            run(masked=False)

        @pl.when(is_last)
        def _():
            run(masked=True)
    else:
        run(masked=False)


def _ab_kernel_3d(x_ref, out_ref, *, n_pre, tile_pre, chunk_pre, ragged):
    """Channel-not-last path.  x_ref: (tile_pre, C, post) block of the
    (pre, C, post) input; `post` is lane-reduced in-kernel, so no HBM
    transpose is needed.  out_ref: (16, C) f32 packed partial sums."""
    i = pl.program_id(0)
    c = x_ref.shape[1]
    g = chunk_pre // 8
    num_chunks = tile_pre // chunk_pre

    def run(masked):
        def body(k, carry):
            pos_acc, abs_acc = carry
            start = k * chunk_pre          # static multiple of 8
            x = x_ref[pl.ds(start, chunk_pre), :, :]
            # Lane-reduce over `post` (XLU slot; kernel is mem-bound).
            pos = jnp.sum((x > 0).astype(jnp.float32), axis=-1)   # (chunk, C)
            ax = jnp.sum(jnp.abs(x).astype(jnp.float32), axis=-1)
            if masked:
                # Masking after the lane reduce is safe: jnp.where selects,
                # so NaN/garbage from overhanging rows does not propagate.
                row = jax.lax.broadcasted_iota(jnp.int32, (chunk_pre, c), 0)
                valid = (row + start + i * tile_pre) < n_pre
                pos = jnp.where(valid, pos, 0.0)
                ax = jnp.where(valid, ax, 0.0)
            if g > 1:
                pos = jnp.sum(pos.reshape(g, 8, c), axis=0)
                ax = jnp.sum(ax.reshape(g, 8, c), axis=0)
            return pos_acc + pos, abs_acc + ax

        init = (jnp.zeros((8, c), jnp.float32), jnp.zeros((8, c), jnp.float32))
        if num_chunks == 1:
            pos_acc, abs_acc = body(0, init)
        else:
            pos_acc, abs_acc = jax.lax.fori_loop(
                0, num_chunks, body, init, unroll=num_chunks <= 8)
        out_ref[0:8, :] = pos_acc
        out_ref[8:16, :] = abs_acc

    if ragged:
        is_last = i == pl.num_programs(0) - 1

        @pl.when(jnp.logical_not(is_last))
        def _():
            run(masked=False)

        @pl.when(is_last)
        def _():
            run(masked=True)
    else:
        run(masked=False)


# ---------------------------------------------------------------------------
# Wrapper (forward pass of ActivationBalancer)
# ---------------------------------------------------------------------------

def activation_balancer_forward(x, channel_dim, min_positive=0.05,
                                max_positive=0.95, max_factor=0.01,
                                min_abs=0.2, max_abs=100.0, training=True,
                                block_target_bytes=8 * 1024 * 1024,
                                chan_tile_target=512):
    """Returns (x_out, stats).  x_out is the original x (forward is identity).
    stats is None when not training (mirrors the PyTorch fast path)."""
    if not training:
        return x, None

    ndim = x.ndim
    if channel_dim < 0:
        channel_dim += ndim
    n_chan = x.shape[channel_dim]
    itemsize = x.dtype.itemsize
    row_pack = max(8, 32 // itemsize)          # sublane packing for the dtype

    keep_shape = [1] * ndim
    keep_shape[channel_dim] = n_chan
    keep_shape = tuple(keep_shape)

    if channel_dim == ndim - 1:
        # ---- channel-last: 2D (rows, C) kernel, optional channel grid axis.
        x2 = x.reshape(-1, n_chan)                         # free reshape
        n_rows = x2.shape[0]
        c_tile = _pick_chan_tile(n_chan, chan_tile_target)
        num_chan_tiles = n_chan // c_tile
        tile_rows, chunk_rows = _pick_row_tile(
            n_rows, c_tile, itemsize, block_target_bytes, row_pack)
        num_row_tiles = (n_rows + tile_rows - 1) // tile_rows
        ragged = (n_rows % tile_rows) != 0
        block_bytes = tile_rows * c_tile * itemsize

        kernel = functools.partial(
            _ab_kernel_2d, n_rows=n_rows, tile_rows=tile_rows,
            chunk_rows=chunk_rows, ragged=ragged)

        out_shape = jax.ShapeDtypeStruct((num_row_tiles * 16, n_chan),
                                         jnp.float32)
        grid = (num_row_tiles, num_chan_tiles)
        in_specs = [pl.BlockSpec((tile_rows, c_tile), lambda i, j: (i, j))]
        out_specs = pl.BlockSpec((16, c_tile), lambda i, j: (i, j))
        dim_sem = ("parallel", "parallel")
        flat_elems = n_rows * n_chan
        operand = x2
    else:
        # ---- channel not last: free (pre, C, post) reshape, 3D kernel.
        pre = 1
        for d in range(channel_dim):
            pre *= x.shape[d]
        post = 1
        for d in range(channel_dim + 1, ndim):
            post *= x.shape[d]
        x3 = x.reshape(pre, n_chan, post)                  # free reshape
        tile_pre, chunk_pre = _pick_row_tile(
            pre, n_chan * post, itemsize, block_target_bytes, 8)
        num_row_tiles = (pre + tile_pre - 1) // tile_pre
        ragged = (pre % tile_pre) != 0
        block_bytes = tile_pre * n_chan * post * itemsize

        kernel = functools.partial(
            _ab_kernel_3d, n_pre=pre, tile_pre=tile_pre,
            chunk_pre=chunk_pre, ragged=ragged)

        out_shape = jax.ShapeDtypeStruct((num_row_tiles * 16, n_chan),
                                         jnp.float32)
        grid = (num_row_tiles,)
        in_specs = [pl.BlockSpec((tile_pre, n_chan, post),
                                 lambda i: (i, 0, 0))]
        out_specs = pl.BlockSpec((16, n_chan), lambda i: (i, 0))
        dim_sem = ("parallel",)
        flat_elems = pre * n_chan * post
        operand = x3
        # TODO(synk): add a post-dim grid axis for very large C*post so
        # tile_pre does not collapse to 8 rows.

    # Explicit VMEM budget: double-buffered input block + small packed output
    # + chunk temporaries + headroom.  Clamp to 48 MiB (fits v7x's 64 MiB
    # physical VMEM); floor of 16 MiB keeps v5e's scoped default behavior.
    vmem_limit = int(min(max(2 * block_bytes + (4 << 20), 16 << 20), 48 << 20))

    cost = pl.CostEstimate(
        flops=4 * flat_elems,
        transcendentals=0,
        bytes_accessed=flat_elems * itemsize + num_row_tiles * 16 * n_chan * 4)

    partial = pl.pallas_call(
        kernel,
        out_shape=out_shape,
        grid_spec=pltpu.PrefetchScalarGridSpec(
            num_scalar_prefetch=0,
            grid=grid,
            in_specs=in_specs,
            out_specs=out_specs,
        ),
        compiler_params=pltpu.CompilerParams(
            dimension_semantics=dim_sem,
            vmem_limit_bytes=vmem_limit),
        cost_estimate=cost,
    )(operand)

    # Finalize on tiny (num_tiles*16, C) arrays in XLA (negligible vs the HBM
    # read of x).
    per_chan = flat_elems // n_chan
    inv_n = jnp.float32(1.0 / per_chan)
    part = partial.reshape(num_row_tiles, 2, 8, n_chan)
    prop = (jnp.sum(part[:, 0], axis=(0, 1)) * inv_n).reshape(keep_shape)
    mean_abs = (jnp.sum(part[:, 1], axis=(0, 1)) * inv_n).reshape(keep_shape)

    if min_positive != 0.0:
        factor1 = jnp.maximum(min_positive - prop, 0.0) * (
            max_factor / min_positive)
    else:
        factor1 = jnp.zeros_like(prop)
    if max_positive != 1.0:
        factor2 = jnp.maximum(prop - max_positive, 0.0) * (
            max_factor / (max_positive - 1.0))
    else:
        factor2 = jnp.zeros_like(prop)
    factor = factor1 + factor2

    stats = {
        "factor": factor,
        "proportion_positive": prop,
        "mean_abs": mean_abs,
        "below_threshold": mean_abs < min_abs,
        "above_threshold": mean_abs > max_abs,
    }
    return x, stats


# ---------------------------------------------------------------------------
# Reference + checks
# ---------------------------------------------------------------------------

def _reference_stats(x, channel_dim, min_positive, max_positive, max_factor,
                     min_abs, max_abs):
    ndim = x.ndim
    if channel_dim < 0:
        channel_dim += ndim
    sum_dims = tuple(d for d in range(ndim) if d != channel_dim)
    xf = x.astype(jnp.float32)
    prop = jnp.mean((xf > 0).astype(jnp.float32), axis=sum_dims, keepdims=True)
    f1 = (jnp.maximum(min_positive - prop, 0.0) * (max_factor / min_positive)
          if min_positive != 0.0 else jnp.zeros_like(prop))
    f2 = (jnp.maximum(prop - max_positive, 0.0) *
          (max_factor / (max_positive - 1.0))
          if max_positive != 1.0 else jnp.zeros_like(prop))
    factor = f1 + f2
    mean_abs = jnp.mean(jnp.abs(xf), axis=sum_dims, keepdims=True)
    return factor, prop, mean_abs, mean_abs < min_abs, mean_abs > max_abs


def _check(x, channel_dim, **kw):
    x_out, stats = activation_balancer_forward(x, channel_dim, **kw)
    jax.block_until_ready((x_out, stats))
    assert jnp.array_equal(x_out, x), "forward must be identity"
    f_r, p_r, m_r, bl_r, ab_r = _reference_stats(
        x, channel_dim,
        kw.get("min_positive", 0.05), kw.get("max_positive", 0.95),
        kw.get("max_factor", 0.01), kw.get("min_abs", 0.2),
        kw.get("max_abs", 100.0))
    assert jnp.allclose(stats["factor"], f_r, atol=1e-6)
    assert jnp.allclose(stats["proportion_positive"], p_r, atol=1e-6)
    assert jnp.allclose(stats["mean_abs"], m_r, atol=1e-5, rtol=1e-5)
    assert jnp.array_equal(stats["below_threshold"], bl_r)
    assert jnp.array_equal(stats["above_threshold"], ab_r)


if __name__ == "__main__":
    key = jax.random.PRNGKey(0)
    k1, k2, k3, k4, k5 = jax.random.split(key, 5)

    # Typical transformer usage: (batch, seq, hidden) with channel_dim = -1.
    x = jax.random.normal(k1, (2, 8, 32), dtype=jnp.float32)
    _check(x, -1)

    # Multiple row tiles + ragged tail (mask only on the last row tile).
    x_big = jax.random.normal(k2, (2, 65, 32), dtype=jnp.float32)
    _check(x_big, -1, block_target_bytes=4096)

    # Channel grid axis: n_chan=256 tiled into 2 x 128-lane tiles, 2 row tiles.
    x_wide = jax.random.normal(k3, (4, 16, 256), dtype=jnp.float32)
    _check(x_wide, -1, block_target_bytes=16 * 1024, chan_tile_target=128)

    # bf16 input: 16-row sublane packing, multi-tile, ragged tail.
    x_bf16 = jax.random.normal(k4, (2, 33, 128), dtype=jnp.bfloat16)
    _check(x_bf16, -1, block_target_bytes=8192)

    # Channel not last: 3D (pre, C, post) kernel path (no HBM transpose).
    x_cnl = jax.random.normal(k5, (2, 4, 5, 7), dtype=jnp.float32)
    _check(x_cnl, 1)

    # Non-training fast path (pure identity, no kernel launch).
    x_eval, s_eval = activation_balancer_forward(x, -1, training=False)
    assert s_eval is None and jnp.array_equal(x_eval, x)

    print("KERNEL_OK")
</pallas_src>

<mosaic_0001>
module attributes {stable_mosaic.version = 11 : i64} {
  func.func @_ab_kernel_2d(%arg0: i32, %arg1: i32, %arg2: memref<16x32xf32, #tpu.memory_space<vmem>>, %arg3: memref<16x32xf32, #tpu.memory_space<vmem>>) attributes {dimension_semantics = [#tpu.dimension_semantics<parallel>, #tpu.dimension_semantics<parallel>], iteration_bounds = array<i64: 1, 1>, scalar_prefetch = 0 : i64, scratch_operands = 0 : i64, tpu.core_type = #tpu.core_type<tc>, window_params = [{transform_indices = @transform_0, window_bounds = array<i64: 16, 32>}, {transform_indices = @transform_1, window_bounds = array<i64: 16, 32>}]} {
    %cst = arith.constant 0.000000e+00 : f32
    %0 = vector.broadcast %cst : f32 to vector<8x32xf32>
    %cst_0 = arith.constant 0.000000e+00 : f32
    %1 = vector.broadcast %cst_0 : f32 to vector<8x32xf32>
    %c0 = arith.constant 0 : index
    %c0_1 = arith.constant 0 : index
    %2 = vector.load %arg2[%c0, %c0_1] : memref<16x32xf32, #tpu.memory_space<vmem>>, vector<16x32xf32>
    %cst_2 = arith.constant 0.000000e+00 : f32
    %3 = vector.broadcast %cst_2 : f32 to vector<16x32xf32>
    %4 = arith.cmpf ogt, %2, %3 : vector<16x32xf32>
    %5 = arith.extui %4 : vector<16x32xi1> to vector<16x32xi32>
    %6 = arith.sitofp %5 : vector<16x32xi32> to vector<16x32xf32>
    %7 = math.absf %2 : vector<16x32xf32>
    %8 = vector.shape_cast %6 : vector<16x32xf32> to vector<2x8x32xf32>
    %cst_3 = arith.constant dense<0.000000e+00> : vector<8x32xf32>
    %9 = vector.multi_reduction <add>, %8, %cst_3 [0] : vector<2x8x32xf32> to vector<8x32xf32>
    %10 = vector.shape_cast %7 : vector<16x32xf32> to vector<2x8x32xf32>
    %cst_4 = arith.constant dense<0.000000e+00> : vector<8x32xf32>
    %11 = vector.multi_reduction <add>, %10, %cst_4 [0] : vector<2x8x32xf32> to vector<8x32xf32>
    %12 = arith.addf %0, %9 : vector<8x32xf32>
    %13 = arith.addf %1, %11 : vector<8x32xf32>
    %c0_5 = arith.constant 0 : index
    %c0_6 = arith.constant 0 : index
    %14 = vector.load %arg3[%c0_5, %c0_6] : memref<16x32xf32, #tpu.memory_space<vmem>>, vector<8x32xf32>
    tpu.vector_store %arg3[%c0_5, %c0_6], %12 {strides = array<i32>} : memref<16x32xf32, #tpu.memory_space<vmem>>, vector<8x32xf32>,
    %c8 = arith.constant 8 : index
    %c0_7 = arith.constant 0 : index
    %15 = vector.load %arg3[%c8, %c0_7] : memref<16x32xf32, #tpu.memory_space<vmem>>, vector<8x32xf32>
    tpu.vector_store %arg3[%c8, %c0_7], %13 {strides = array<i32>} : memref<16x32xf32, #tpu.memory_space<vmem>>, vector<8x32xf32>,
    return
  }
  func.func @transform_0(%arg0: i32, %arg1: i32) -> (i32, i32) {
    %c0_i32 = arith.constant 0 : i32
    return %arg0, %arg1 : i32, i32
  }
  func.func @transform_1(%arg0: i32, %arg1: i32) -> (i32, i32) {
    %c0_i32 = arith.constant 0 : i32
    return %arg0, %arg1 : i32, i32
  }
}

</mosaic_0001>

<llo_original>
// kernel: tpu_custom_call.1
$region0: #{tpu_custom_call.1}
  #allocation0 [shape = 'u32[]', space=smem, size = 0x4, offset = 0x4, fixed_abs, tag = 'smem constant byte address 0x4 - core index']
  #allocation1 [shape = 'u32[144,128]{1,0:T(1,128)}', space=vmem, size = 0x12000, scoped, tag = 'internal scratch']
  %s0 = inlined_call_operand.hbm [shape: f32[16,32], index: 0, kind: input, shape index: {}]
  %s1 = inlined_call_operand.hbm [shape: f32[16,32], index: 1, kind: output, shape index: {}]
  %s2 = sld [smem:[#allocation0]]
  $region18: #{tpu_custom_call.1} parent=0
    _
  %s4 = ssub.s32 1, %s2
  %s5 = scalar_select 0, %s4, %s2
  $region1: #{tpu_custom_call.1} parent=0
    #allocation2 [shape = 'u8[8192]{0}', space=vmem, size = 0x2000, scoped, tag = 'input window, operand 0, single buffered']
    #allocation3 [shape = 's32[1]{0}', space=sflag, size = 0x4, scoped, tag = 'scoped memory for tpu_custom_call.1']
    #allocation4 [shape = 's32[1]{0}', space=sflag, size = 0x4, scoped, tag = 'scoped memory for tpu_custom_call.1']
    #allocation5 [shape = 'u8[8192]{0}', space=vmem, size = 0x2000, scoped, tag = 'output window, operand 0, single buffered']
    %6 = vsyncpa [#allocation3], 0
    %7 = vsyncpa [#allocation4], 0
    // Predicated region
    $region2: #{tpu_custom_call.1} parent=1 // pred_check
      _
    $region3: #{tpu_custom_call.1} parent=1 // pred_check_branch
      %9 = sbr.rel (0) target = $region5
    $region4: #{tpu_custom_call.1} parent=1 // pred_region
      %s11 = ssub.s32 256, 256
      %12 = vsyncadd [#allocation3], %s11
      %s13 = sshll.u32 [#allocation2], 4
      %s14 = int_to_ptr.vmem [resolvable:$true] %s13
      %19 = dma.hbm_to_vmem [thread:$0]  %s0, 256, %s14, [#allocation3], 128, 128, 8
    $region5: #{tpu_custom_call.1} parent=1 // pred_fallthru
      _
    // Predicated region
    $region6: #{tpu_custom_call.1} parent=1 // pred_check
      _
    $region7: #{tpu_custom_call.1} parent=1 // pred_check_branch
      %21 = sbr.rel (0) target = $region9
    $region8: #{tpu_custom_call.1} parent=1 // pred_region
      %22 = dma.done [#allocation3], 256
    $region9: #{tpu_custom_call.1} parent=1 // pred_fallthru
      _
    %v23 = vld [vmem:[#allocation2] sm:$0xff]
    %v24 = vld [vmem:[#allocation2 + $0x8] sm:$0xff]
    %vm25 = vcmp.gt.f32.partialorder %v23, 0.0
    %vm26 = vcmp.gt.f32.partialorder %v24, 0.0
    %v27 = vsel %vm25, 1, 0
    %v28 = vsel %vm26, 1, 0
    %v29 = vcvt.s32.f32 %v27
    %v30 = vcvt.s32.f32 %v28
    %v31 = vand.u32 2147483647, %v23
    %v32 = vand.u32 2147483647, %v24
    %vm33 = vcmask 261120
    %v34 = vsel %vm33, %v29, 0.0
    %v35 = vsel %vm33, %v30, 0.0
    %v36 = vadd.f32 %v34, %v35
    %v37 = vsel %vm33, %v31, 0.0
    %v38 = vsel %vm33, %v32, 0.0
    %v39 = vadd.f32 %v37, %v38
    %v40 = vadd.f32 %v36, 0.0
    %v41 = vadd.f32 %v39, 0.0
    %42 = vst.msk [vmem:[#allocation5] sm:$0xff] %vm33, %v40
    %43 = vst.msk [vmem:[#allocation5 + $0x8] sm:$0xff] %vm33, %v41
    // Predicated region
    $region10: #{tpu_custom_call.1} parent=1 // pred_check
      _
    $region11: #{tpu_custom_call.1} parent=1 // pred_check_branch
      %45 = sbr.rel (0) target = $region13
    $region12: #{tpu_custom_call.1} parent=1 // pred_region
      %s47 = ssub.s32 256, 256
      %48 = vsyncadd [#allocation4], %s47
      %s49 = sshll.u32 [#allocation5], 4
      %s50 = int_to_ptr.vmem [resolvable:$true] %s49
      %55 = dma.vmem_to_hbm [thread:$0]  %s50, 256, %s1, [#allocation4], 128, 128, 8
    $region13: #{tpu_custom_call.1} parent=1 // pred_fallthru
      _
    // Predicated region
    $region14: #{tpu_custom_call.1} parent=1 // pred_check
      _
    $region15: #{tpu_custom_call.1} parent=1 // pred_check_branch
      %57 = sbr.rel (0) target = $region17
    $region16: #{tpu_custom_call.1} parent=1 // pred_region
      %58 = dma.done [#allocation4], 256
    $region17: #{tpu_custom_call.1} parent=1 // pred_fallthru
      _
    %59 = vsyncpa [#allocation3], 1
    %60 = vsyncpa [#allocation4], 1

</llo_original>
